<compile_context>
chip_gen: v7x
topology: tpu7x:2x2x1
jax: 0.10.0
libtpu: 0.0.40
codegen_flags: <defaults>
</compile_context>

<pallas_src>
import functools

import jax
import jax.numpy as jnp
from jax.experimental import pallas as pl
from jax.experimental.pallas import tpu as pltpu

STUDENT_TEMP = 0.1
INV_STUDENT_TEMP = 1.0 / STUDENT_TEMP


def _dino_loss_kernel(inv_temp_ref, student_ref, teacher_ref, center_ref,
                      loss_sum_ref, teacher_sum_ref, q_scratch,
                      *, tb, valid_batch, padded_batch):
    """Grid = (batch tiles, crops).

    inv_temp_ref: (1, 1) SMEM          student_ref: (1, TB, D)
    teacher_ref:  (2, TB, D)           center_ref:  (1, D)
    loss_sum_ref: (1, 1, 1)  partial loss sum for this batch tile (acc over crops)
    teacher_sum_ref: (1, 1, D) teacher row-sum for this batch tile (center EMA)
    q_scratch:    (3, TB, D) f32 = [q0, q1, q0 + q1]
    """
    b = pl.program_id(0)
    v = pl.program_id(1)

    # ---- per-batch-tile setup: teacher softmax + center sum (only at v == 0) ----
    @pl.when(v == 0)
    def _():
        inv_temp = inv_temp_ref[0, 0]
        teacher = teacher_ref[...].astype(jnp.float32)                 # (2, TB, D)
        center = center_ref[...].astype(jnp.float32)                   # (1, D)
        t = (teacher - center) * inv_temp
        t_max = jnp.max(t, axis=-1, keepdims=True)
        t_exp = jnp.exp(t - t_max)
        denom = jnp.sum(t_exp, axis=-1, keepdims=True)                 # (2, TB, 1)
        # Exact per-row reciprocal (cheap) to keep the 1e-4 loss tolerance.
        q = t_exp * pl.reciprocal(denom, approx=False)                 # (2, TB, D)
        q0 = q[0]
        q1 = q[1]
        q_scratch[0] = q0
        q_scratch[1] = q1
        q_scratch[2] = q0 + q1                                         # reused for v >= 2
        # Per-tile teacher row-sum (zero-padded rows contribute 0).
        teacher_sum_ref[...] = jnp.sum(teacher, axis=(0, 1)).reshape(1, 1, -1)
        loss_sum_ref[...] = jnp.zeros_like(loss_sum_ref)

    # ---- student crop v: log-softmax folded into per-row scalars ----------------
    s = student_ref[0].astype(jnp.float32) * INV_STUDENT_TEMP          # (TB, D)
    s_max = jnp.max(s, axis=-1, keepdims=True)
    s_shift = s - s_max
    lse = jnp.log(jnp.sum(jnp.exp(s_shift), axis=-1, keepdims=True))   # (TB, 1)

    # v == 0 pairs with teacher crop 1 (q1); v == 1 with q0; v >= 2 with q0 + q1.
    q_idx = jnp.where(v == 0, 1, jnp.where(v == 1, 0, 2))
    q_eff = q_scratch[q_idx]                                           # (TB, D)
    w = jnp.where(v < 2, 1.0, 2.0)                                     # == sum_d(q_eff)

    # sum_d(-q_eff * log_p) per row = w * lse - sum_d(q_eff * s_shift)
    cross = jnp.sum(q_eff * s_shift, axis=-1, keepdims=True)           # (TB, 1)
    loss_rows = w * lse - cross                                        # (TB, 1)
    if valid_batch != padded_batch:
        row_ids = jax.lax.broadcasted_iota(jnp.int32, (tb, 1), 0) + b * tb
        loss_rows = jnp.where(row_ids < valid_batch, loss_rows, 0.0)
    loss_sum_ref[...] += jnp.sum(loss_rows).reshape(1, 1, 1)


def _vmem_config(vmem_budget_bytes=None):
    """(vmem_limit_bytes for the compiler, tile-chooser budget), generation-aware."""
    cap = None
    try:
        cap = getattr(pltpu.get_tpu_info(), "vmem_capacity_bytes", None)
    except Exception:
        cap = None
    if cap is None:
        cap = 64 * 1024 * 1024            # conservative (v7x-sized) fallback
    if cap <= 64 * 1024 * 1024:           # v7x-class: 64 MiB per TensorCore
        limit, budget = 44 * 1024 * 1024, 26 * 1024 * 1024
    else:                                 # v5e / v6e: 128 MiB
        limit, budget = 100 * 1024 * 1024, 64 * 1024 * 1024
    if vmem_budget_bytes is not None:
        budget = min(budget, vmem_budget_bytes)
    return limit, budget


def _choose_batch_tile(batch, d, in_itemsize, vmem_budget_bytes):
    """Largest batch tile (multiple of 8) fitting the VMEM budget.

    Per-step working set (crop axis lives in the grid, so independent of ncrops):
    double-buffered student (1,tb,d) + teacher (2,tb,d) blocks in the input dtype,
    plus the (3,tb,d) f32 q-scratch and ~8 tb*d-sized f32 softmax transients.
    """
    per_row = (1 + 2) * d * in_itemsize * 2 + (3 + 8) * d * 4
    max_rows = max(int(vmem_budget_bytes // per_row), 8)
    tb = max((max_rows // 8) * 8, 8)
    batch_p = -(-batch // 8) * 8                 # batch rounded up to sublane tile
    tb = min(tb, batch_p)
    # Keep >= 2 grid steps along the batch axis so ("parallel", ...) can shard work
    # across both v7x TensorCores (harmless elsewhere).
    if batch_p >= 16:
        tb = min(tb, max((batch_p // 2 // 8) * 8, 8))
    return tb


class DINOLossPallas:
    def __init__(self, out_dim, ncrops, warmup_teacher_temp, teacher_temp,
                 warmup_teacher_temp_epochs, nepochs, center_momentum=0.9,
                 use_cls_token_only=False, vmem_budget_bytes=None):
        assert ncrops >= 2
        self.out_dim = out_dim
        self.ncrops = ncrops
        self.center_momentum = center_momentum
        self.vmem_limit_bytes, self.vmem_budget_bytes = _vmem_config(vmem_budget_bytes)
        self.center = jnp.zeros((1, out_dim), jnp.float32)
        self.teacher_temp_schedule = jnp.concatenate([
            jnp.linspace(warmup_teacher_temp, teacher_temp, warmup_teacher_temp_epochs),
            jnp.ones((nepochs - warmup_teacher_temp_epochs,)) * teacher_temp,
        ]).astype(jnp.float32)

    def __call__(self, student_output, teacher_output, epoch):
        n_student, d = student_output.shape
        n_teacher, d_t = teacher_output.shape
        assert d == self.out_dim and d_t == self.out_dim
        assert n_student % self.ncrops == 0 and n_teacher % 2 == 0
        batch = n_student // self.ncrops
        assert n_teacher == 2 * batch

        # Crops on a leading, untiled axis; rows -> sublanes, D -> lanes.
        # (Inputs may be bf16 on v5e/v6e to halve HBM traffic; math stays f32 in-kernel.)
        student3 = student_output.reshape(self.ncrops, batch, d)
        teacher3 = teacher_output.reshape(2, batch, d)

        temp = self.teacher_temp_schedule[epoch]
        inv_temp = (1.0 / temp).astype(jnp.float32).reshape(1, 1)

        tb = _choose_batch_tile(batch, d, student_output.dtype.itemsize,
                                self.vmem_budget_bytes)
        num_tiles = -(-batch // tb)
        batch_padded = num_tiles * tb
        if batch_padded != batch:
            pad = ((0, 0), (0, batch_padded - batch), (0, 0))
            student3 = jnp.pad(student3, pad)
            teacher3 = jnp.pad(teacher3, pad)

        kernel = functools.partial(_dino_loss_kernel, tb=tb, valid_batch=batch,
                                   padded_batch=batch_padded)

        grid_spec = pltpu.PrefetchScalarGridSpec(
            num_scalar_prefetch=0,
            grid=(num_tiles, self.ncrops),                                # crops innermost
            in_specs=[
                pl.BlockSpec(memory_space=pltpu.MemorySpace.SMEM),        # inv_temp
                pl.BlockSpec((1, tb, d), lambda b, v: (v, b, 0)),         # student crop v
                pl.BlockSpec((2, tb, d), lambda b, v: (0, b, 0)),         # teacher (resident over v)
                pl.BlockSpec((1, d), lambda b, v: (0, 0)),                # center
            ],
            out_specs=(
                pl.BlockSpec((1, 1, 1), lambda b, v: (b, 0, 0)),          # loss partials
                pl.BlockSpec((1, 1, d), lambda b, v: (b, 0, 0)),          # teacher row-sums
            ),
            scratch_shapes=[pltpu.VMEM((3, tb, d), jnp.float32)],         # q0, q1, q0+q1
        )

        loss_parts, teacher_sums = pl.pallas_call(
            kernel,
            grid_spec=grid_spec,
            out_shape=(
                jax.ShapeDtypeStruct((num_tiles, 1, 1), jnp.float32),
                jax.ShapeDtypeStruct((num_tiles, 1, d), jnp.float32),
            ),
            compiler_params=pltpu.CompilerParams(
                dimension_semantics=("parallel", "arbitrary"),
                vmem_limit_bytes=self.vmem_limit_bytes,
            ),
        )(inv_temp, student3, teacher3, self.center)

        # Tiny final reductions in plain jnp (keeps the batch grid axis parallel).
        n_terms = 2 * (self.ncrops - 1)
        loss = jnp.sum(loss_parts) / (n_terms * batch)

        batch_center = jnp.sum(teacher_sums, axis=(0, 1)) / (2 * batch)   # (D,)
        # TODO(synk): for a fully jittable training step, thread `center` as an explicit
        # functional input/output instead of a Python attribute.
        self.center = (self.center * self.center_momentum
                       + batch_center[None, :] * (1.0 - self.center_momentum))
        return loss


def _reference(student_output, teacher_output, center, temp, ncrops, center_momentum):
    batch = student_output.shape[0] // ncrops
    student = student_output.astype(jnp.float32) / STUDENT_TEMP
    log_p = jax.nn.log_softmax(student, axis=-1)
    q = jax.nn.softmax((teacher_output.astype(jnp.float32) - center) / temp, axis=-1)
    total, n = 0.0, 0
    for iq in range(2):
        qi = q[iq * batch:(iq + 1) * batch]
        for v in range(ncrops):
            if v == iq:
                continue
            total += jnp.mean(jnp.sum(-qi * log_p[v * batch:(v + 1) * batch], axis=-1))
            n += 1
    loss = total / n
    new_center = center * center_momentum + jnp.mean(
        teacher_output, axis=0, keepdims=True) * (1 - center_momentum)
    return loss, new_center


if __name__ == "__main__":
    key = jax.random.PRNGKey(0)
    out_dim = 128
    ncrops = 4
    batch = 12          # not a multiple of 8 -> exercises the padded / masked last tile
    epoch = 3

    k1, k2 = jax.random.split(key)
    student_output = jax.random.normal(k1, (ncrops * batch, out_dim), jnp.float32)
    teacher_output = jax.random.normal(k2, (2 * batch, out_dim), jnp.float32)

    loss_mod = DINOLossPallas(
        out_dim=out_dim, ncrops=ncrops,
        warmup_teacher_temp=0.04, teacher_temp=0.07,
        warmup_teacher_temp_epochs=10, nepochs=100,
        center_momentum=0.9,
    )

    center_before = loss_mod.center
    temp = loss_mod.teacher_temp_schedule[epoch]

    loss = loss_mod(student_output, teacher_output, epoch)
    jax.block_until_ready(loss)
    jax.block_until_ready(loss_mod.center)

    ref_loss, ref_center = _reference(
        student_output, teacher_output, center_before, temp, ncrops, 0.9)
    assert jnp.allclose(loss, ref_loss, atol=1e-4, rtol=1e-4), (loss, ref_loss)
    assert jnp.allclose(loss_mod.center, ref_center, atol=1e-5, rtol=1e-5)

    print("KERNEL_OK")
</pallas_src>

<mosaic_0001>
module attributes {stable_mosaic.version = 11 : i64} {
  func.func @_dino_loss_kernel(%arg0: i32, %arg1: i32, %arg2: memref<1x1xf32, #tpu.memory_space<smem>>, %arg3: memref<1x8x128xf32, #tpu.memory_space<vmem>>, %arg4: memref<2x8x128xf32, #tpu.memory_space<vmem>>, %arg5: memref<1x128xf32, #tpu.memory_space<vmem>>, %arg6: memref<1x1x1xf32, #tpu.memory_space<vmem>>, %arg7: memref<1x1x128xf32, #tpu.memory_space<vmem>>, %arg8: memref<3x8x128xf32, #tpu.memory_space<vmem>>) attributes {dimension_semantics = [#tpu.dimension_semantics<parallel>, #tpu.dimension_semantics<arbitrary>], iteration_bounds = array<i64: 2, 4>, scalar_prefetch = 0 : i64, scratch_operands = 1 : i64, tpu.core_type = #tpu.core_type<tc>, window_params = [{transform_indices = @transform_0, window_bounds = array<i64: 1, 1>}, {transform_indices = @transform_1, window_bounds = array<i64: 1, 8, 128>}, {transform_indices = @transform_2, window_bounds = array<i64: 2, 8, 128>}, {pipeline_mode = #tpu.pipeline_mode<synchronous>, transform_indices = @transform_3, window_bounds = array<i64: 1, 128>}, {transform_indices = @transform_4, window_bounds = array<i64: 1, 1, 1>}, {transform_indices = @transform_5, window_bounds = array<i64: 1, 1, 128>}]} {
    %c0_i32 = arith.constant 0 : i32
    %0 = arith.cmpi eq, %arg1, %c0_i32 : i32
    %1 = arith.extui %0 : i1 to i32
    %c0_i32_0 = arith.constant 0 : i32
    %2 = arith.cmpi ne, %1, %c0_i32_0 : i32
    scf.if %2 {
      %c0_22 = arith.constant 0 : index
      %c0_23 = arith.constant 0 : index
      %46 = memref.load %arg2[%c0_22, %c0_23] : memref<1x1xf32, #tpu.memory_space<smem>>
      %c0_24 = arith.constant 0 : index
      %c0_25 = arith.constant 0 : index
      %c0_26 = arith.constant 0 : index
      %47 = vector.load %arg4[%c0_24, %c0_25, %c0_26] : memref<2x8x128xf32, #tpu.memory_space<vmem>>, vector<2x8x128xf32>
      %c0_27 = arith.constant 0 : index
      %c0_28 = arith.constant 0 : index
      %48 = vector.load %arg5[%c0_27, %c0_28] : memref<1x128xf32, #tpu.memory_space<vmem>>, vector<1x128xf32>
      %49 = vector.shape_cast %48 : vector<1x128xf32> to vector<1x1x128xf32>
      %50 = vector.broadcast %49 : vector<1x1x128xf32> to vector<2x8x128xf32>
      %51 = arith.subf %47, %50 : vector<2x8x128xf32>
      %52 = vector.broadcast %46 : f32 to vector<2x8x128xf32>
      %53 = arith.mulf %51, %52 : vector<2x8x128xf32>
      %cst_29 = arith.constant dense<0xFF800000> : vector<2x8xf32>
      %54 = vector.multi_reduction <maximumf>, %53, %cst_29 [2] : vector<2x8x128xf32> to vector<2x8xf32>
      %55 = vector.shape_cast %54 : vector<2x8xf32> to vector<2x8x1xf32>
      %56 = vector.broadcast %55 : vector<2x8x1xf32> to vector<2x8x128xf32>
      %57 = arith.subf %53, %56 : vector<2x8x128xf32>
      %58 = math.exp %57 : vector<2x8x128xf32>
      %cst_30 = arith.constant dense<0.000000e+00> : vector<2x8xf32>
      %59 = vector.multi_reduction <add>, %58, %cst_30 [2] : vector<2x8x128xf32> to vector<2x8xf32>
      %60 = vector.shape_cast %59 : vector<2x8xf32> to vector<2x8x1xf32>
      %61 = tpu.reciprocal %60 : vector<2x8x1xf32> -> vector<2x8x1xf32>
      %62 = vector.broadcast %61 : vector<2x8x1xf32> to vector<2x8x128xf32>
      %63 = arith.mulf %58, %62 : vector<2x8x128xf32>
      %64 = vector.extract_strided_slice %63 {offsets = [0, 0, 0], sizes = [1, 8, 128], strides = [1, 1, 1]} : vector<2x8x128xf32> to vector<1x8x128xf32>
      %65 = vector.shape_cast %64 : vector<1x8x128xf32> to vector<8x128xf32>
      %66 = vector.extract_strided_slice %63 {offsets = [1, 0, 0], sizes = [1, 8, 128], strides = [1, 1, 1]} : vector<2x8x128xf32> to vector<1x8x128xf32>
      %67 = vector.shape_cast %66 : vector<1x8x128xf32> to vector<8x128xf32>
      %c0_31 = arith.constant 0 : index
      %c0_32 = arith.constant 0 : index
      %c0_33 = arith.constant 0 : index
      %68 = vector.load %arg8[%c0_31, %c0_32, %c0_33] : memref<3x8x128xf32, #tpu.memory_space<vmem>>, vector<1x8x128xf32>
      %69 = vector.shape_cast %68 : vector<1x8x128xf32> to vector<8x128xf32>
      %70 = vector.shape_cast %65 : vector<8x128xf32> to vector<1x8x128xf32>
      tpu.vector_store %arg8[%c0_31, %c0_32, %c0_33], %70 {strides = array<i32>} : memref<3x8x128xf32, #tpu.memory_space<vmem>>, vector<1x8x128xf32>,
      %c1 = arith.constant 1 : index
      %c0_34 = arith.constant 0 : index
      %c0_35 = arith.constant 0 : index
      %71 = vector.load %arg8[%c1, %c0_34, %c0_35] : memref<3x8x128xf32, #tpu.memory_space<vmem>>, vector<1x8x128xf32>
      %72 = vector.shape_cast %71 : vector<1x8x128xf32> to vector<8x128xf32>
      %73 = vector.shape_cast %67 : vector<8x128xf32> to vector<1x8x128xf32>
      tpu.vector_store %arg8[%c1, %c0_34, %c0_35], %73 {strides = array<i32>} : memref<3x8x128xf32, #tpu.memory_space<vmem>>, vector<1x8x128xf32>,
      %74 = arith.addf %65, %67 : vector<8x128xf32>
      %c2 = arith.constant 2 : index
      %c0_36 = arith.constant 0 : index
      %c0_37 = arith.constant 0 : index
      %75 = vector.load %arg8[%c2, %c0_36, %c0_37] : memref<3x8x128xf32, #tpu.memory_space<vmem>>, vector<1x8x128xf32>
      %76 = vector.shape_cast %75 : vector<1x8x128xf32> to vector<8x128xf32>
      %77 = vector.shape_cast %74 : vector<8x128xf32> to vector<1x8x128xf32>
      tpu.vector_store %arg8[%c2, %c0_36, %c0_37], %77 {strides = array<i32>} : memref<3x8x128xf32, #tpu.memory_space<vmem>>, vector<1x8x128xf32>,
      %cst_38 = arith.constant dense<0.000000e+00> : vector<128xf32>
      %78 = vector.multi_reduction <add>, %47, %cst_38 [0, 1] : vector<2x8x128xf32> to vector<128xf32>
      %79 = vector.shape_cast %78 : vector<128xf32> to vector<1x1x128xf32>
      %c0_39 = arith.constant 0 : index
      %c0_40 = arith.constant 0 : index
      %c0_41 = arith.constant 0 : index
      %80 = vector.load %arg7[%c0_39, %c0_40, %c0_41] : memref<1x1x128xf32, #tpu.memory_space<vmem>>, vector<1x1x128xf32>
      tpu.vector_store %arg7[%c0_39, %c0_40, %c0_41], %79 {strides = array<i32>} : memref<1x1x128xf32, #tpu.memory_space<vmem>>, vector<1x1x128xf32>,
      %cst_42 = arith.constant 0.000000e+00 : f32
      %81 = vector.broadcast %cst_42 : f32 to vector<1x1x1xf32>
      %c0_43 = arith.constant 0 : index
      %c0_44 = arith.constant 0 : index
      %c0_45 = arith.constant 0 : index
      %82 = vector.load %arg6[%c0_43, %c0_44, %c0_45] : memref<1x1x1xf32, #tpu.memory_space<vmem>>, vector<1x1x1xf32>
      tpu.vector_store %arg6[%c0_43, %c0_44, %c0_45], %81 {strides = array<i32>} : memref<1x1x1xf32, #tpu.memory_space<vmem>>, vector<1x1x1xf32>,
    } else {
    }
    %c0 = arith.constant 0 : index
    %c0_1 = arith.constant 0 : index
    %c0_2 = arith.constant 0 : index
    %3 = vector.load %arg3[%c0, %c0_1, %c0_2] : memref<1x8x128xf32, #tpu.memory_space<vmem>>, vector<1x8x128xf32>
    %4 = vector.shape_cast %3 : vector<1x8x128xf32> to vector<8x128xf32>
    %cst = arith.constant 1.000000e+01 : f32
    %5 = vector.broadcast %cst : f32 to vector<8x128xf32>
    %6 = arith.mulf %4, %5 : vector<8x128xf32>
    %cst_3 = arith.constant dense<0xFF800000> : vector<8xf32>
    %7 = vector.multi_reduction <maximumf>, %6, %cst_3 [1] : vector<8x128xf32> to vector<8xf32>
    %8 = vector.shape_cast %7 : vector<8xf32> to vector<8x1xf32>
    %9 = vector.broadcast %8 : vector<8x1xf32> to vector<8x128xf32>
    %10 = arith.subf %6, %9 : vector<8x128xf32>
    %11 = math.exp %10 : vector<8x128xf32>
    %cst_4 = arith.constant dense<0.000000e+00> : vector<8xf32>
    %12 = vector.multi_reduction <add>, %11, %cst_4 [1] : vector<8x128xf32> to vector<8xf32>
    %13 = vector.shape_cast %12 : vector<8xf32> to vector<8x1xf32>
    %14 = math.log %13 : vector<8x1xf32>
    %c0_i32_5 = arith.constant 0 : i32
    %15 = arith.cmpi eq, %arg1, %c0_i32_5 : i32
    %c1_i32 = arith.constant 1 : i32
    %16 = arith.cmpi eq, %arg1, %c1_i32 : i32
    %c0_i32_6 = arith.constant 0 : i32
    %c2_i32 = arith.constant 2 : i32
    %17 = arith.select %16, %c0_i32_6, %c2_i32 : i32
    %c1_i32_7 = arith.constant 1 : i32
    %18 = arith.select %15, %c1_i32_7, %17 : i32
    %19 = arith.index_cast %18 : i32 to index
    %c0_8 = arith.constant 0 : index
    %c0_9 = arith.constant 0 : index
    %20 = vector.load %arg8[%19, %c0_8, %c0_9] : memref<3x8x128xf32, #tpu.memory_space<vmem>>, vector<1x8x128xf32>
    %21 = vector.shape_cast %20 : vector<1x8x128xf32> to vector<8x128xf32>
    %c2_i32_10 = arith.constant 2 : i32
    %22 = arith.cmpi slt, %arg1, %c2_i32_10 : i32
    %cst_11 = arith.constant 1.000000e+00 : f32
    %cst_12 = arith.constant 2.000000e+00 : f32
    %23 = arith.select %22, %cst_11, %cst_12 : f32
    %24 = arith.mulf %21, %10 : vector<8x128xf32>
    %cst_13 = arith.constant dense<0.000000e+00> : vector<8xf32>
    %25 = vector.multi_reduction <add>, %24, %cst_13 [1] : vector<8x128xf32> to vector<8xf32>
    %26 = vector.shape_cast %25 : vector<8xf32> to vector<8x1xf32>
    %27 = vector.broadcast %23 : f32 to vector<8x1xf32>
    %28 = arith.mulf %27, %14 : vector<8x1xf32>
    %29 = arith.subf %28, %26 : vector<8x1xf32>
    %30 = tpu.iota {dimensions = array<i32: 0>} : vector<8x1xi32>
    %c8_i32 = arith.constant 8 : i32
    %31 = arith.muli %arg0, %c8_i32 : i32
    %32 = vector.broadcast %31 : i32 to vector<8x1xi32>
    %33 = arith.addi %30, %32 : vector<8x1xi32>
    %c12_i32 = arith.constant 12 : i32
    %34 = vector.broadcast %c12_i32 : i32 to vector<8x1xi32>
    %35 = arith.cmpi slt, %33, %34 : vector<8x1xi32>
    %cst_14 = arith.constant 0.000000e+00 : f32
    %36 = vector.broadcast %cst_14 : f32 to vector<8x1xf32>
    %37 = arith.select %35, %29, %36 : vector<8x1xi1>, vector<8x1xf32>
    %c0_15 = arith.constant 0 : index
    %c0_16 = arith.constant 0 : index
    %c0_17 = arith.constant 0 : index
    %38 = vector.load %arg6[%c0_15, %c0_16, %c0_17] : memref<1x1x1xf32, #tpu.memory_space<vmem>>, vector<1x1x1xf32>
    %39 = vector.shape_cast %37 : vector<8x1xf32> to vector<1x8x1xf32>
    %cst_18 = arith.constant dense<0.000000e+00> : vector<1xf32>
    %40 = vector.multi_reduction <add>, %39, %cst_18 [1, 2] : vector<1x8x1xf32> to vector<1xf32>
    %41 = vector.shape_cast %40 : vector<1xf32> to vector<1x1x1xf32>
    %42 = vector.extract %41[0, 0, 0] : f32 from vector<1x1x1xf32>
    %43 = vector.broadcast %42 : f32 to vector<1x1x1xf32>
    %44 = arith.addf %38, %43 : vector<1x1x1xf32>
    %c0_19 = arith.constant 0 : index
    %c0_20 = arith.constant 0 : index
    %c0_21 = arith.constant 0 : index
    %45 = vector.load %arg6[%c0_19, %c0_20, %c0_21] : memref<1x1x1xf32, #tpu.memory_space<vmem>>, vector<1x1x1xf32>
    tpu.vector_store %arg6[%c0_19, %c0_20, %c0_21], %44 {strides = array<i32>} : memref<1x1x1xf32, #tpu.memory_space<vmem>>, vector<1x1x1xf32>,
    return
  }
  func.func @transform_0(%arg0: i32, %arg1: i32) -> (i32, i32) {
    %c0_i32 = arith.constant 0 : i32
    %c0_i32_0 = arith.constant 0 : i32
    %c0_i32_1 = arith.constant 0 : i32
    return %c0_i32, %c0_i32_0 : i32, i32
  }
  func.func @transform_1(%arg0: i32, %arg1: i32) -> (i32, i32, i32) {
    %c0_i32 = arith.constant 0 : i32
    %c0_i32_0 = arith.constant 0 : i32
    return %arg1, %arg0, %c0_i32 : i32, i32, i32
  }
  func.func @transform_2(%arg0: i32, %arg1: i32) -> (i32, i32, i32) {
    %c0_i32 = arith.constant 0 : i32
    %c0_i32_0 = arith.constant 0 : i32
    %c0_i32_1 = arith.constant 0 : i32
    return %c0_i32, %arg0, %c0_i32_0 : i32, i32, i32
  }
  func.func @transform_3(%arg0: i32, %arg1: i32) -> (i32, i32) {
    %c0_i32 = arith.constant 0 : i32
    %c0_i32_0 = arith.constant 0 : i32
    %c0_i32_1 = arith.constant 0 : i32
    return %c0_i32, %c0_i32_0 : i32, i32
  }
  func.func @transform_4(%arg0: i32, %arg1: i32) -> (i32, i32, i32) {
    %c0_i32 = arith.constant 0 : i32
    %c0_i32_0 = arith.constant 0 : i32
    %c0_i32_1 = arith.constant 0 : i32
    return %arg0, %c0_i32, %c0_i32_0 : i32, i32, i32
  }
  func.func @transform_5(%arg0: i32, %arg1: i32) -> (i32, i32, i32) {
    %c0_i32 = arith.constant 0 : i32
    %c0_i32_0 = arith.constant 0 : i32
    %c0_i32_1 = arith.constant 0 : i32
    return %arg0, %c0_i32, %c0_i32_0 : i32, i32, i32
  }
}

</mosaic_0001>

<llo_original>
// kernel: tpu_custom_call.1
$region0: #{tpu_custom_call.1}
  #allocation0 [shape = 'u32[]', space=smem, size = 0x4, offset = 0x4, fixed_abs, tag = 'smem constant byte address 0x4 - core index']
  #allocation1 [shape = 'u32[144,128]{1,0:T(1,128)}', space=vmem, size = 0x12000, scoped, tag = 'internal scratch']
  #allocation2 [shape = 'f32[3,8,128]{2,1,0:T(8,128)}', space=vmem, size = 0x3000, scoped, tag = 'scratch operand']
  #allocation3 [shape = 'f32[1,1]{1,0:T(1,128)S(6)}', space=smem, size = 0x200, scoped, tag = 'scoped memory for tpu_custom_call.1']
  %s0 = inlined_call_operand.<no memory space> [shape: f32[1,1], index: 0, kind: input, shape index: {}]
  %s1 = inlined_call_operand.hbm [shape: f32[4,16,128], index: 1, kind: input, shape index: {}]
  %s2 = inlined_call_operand.hbm [shape: f32[2,16,128], index: 2, kind: input, shape index: {}]
  %s3 = inlined_call_operand.vmem [shape: f32[1,128], index: 3, kind: input, shape index: {}]
  %s4 = inlined_call_operand.vmem [shape: f32[2,1,1], index: 4, kind: output, shape index: {0}]
  %s5 = inlined_call_operand.hbm [shape: f32[2,1,128], index: 5, kind: output, shape index: {1}]
  %6 = xla_tuple %s4, %s5
  %s7 = sld [smem:[#allocation0]]
  $region69: #{tpu_custom_call.1} parent=0
    _
  %s9 = ssub.s32 1, %s7
  %s10 = scalar_select 0, %s9, %s7
  %11 = sst [smem:[#allocation3]] %s0
  $region1: #{tpu_custom_call.1} parent=0
    #allocation4 [shape = 'u8[8192]{0}', space=vmem, size = 0x2000, scoped, tag = 'input window, operand 1']
    #allocation5 [shape = 's32[2]{0}', space=sflag, size = 0x8, scoped, tag = 'scoped memory for tpu_custom_call.1']
    #allocation6 [shape = 's32[2]{0}', space=sflag, size = 0x8, scoped, tag = 'scoped memory for tpu_custom_call.1']
    #allocation7 [shape = 'u8[16384]{0}', space=vmem, size = 0x4000, scoped, tag = 'input window, operand 2']
    #allocation8 [shape = 's32[2]{0}', space=sflag, size = 0x8, scoped, tag = 'scoped memory for tpu_custom_call.1']
    #allocation9 [shape = 'u8[1024]{0}', space=vmem, size = 0x400, scoped, tag = 'output window, operand 1']
    %12 = vsyncpa [#allocation5], 0
    %s13 = scalar_lea.sflag [#allocation5], 1
    %14 = vsyncpa %s13, 0
    %15 = vsyncpa [#allocation8], 0
    %s16 = scalar_lea.sflag [#allocation8], 1
    %17 = vsyncpa %s16, 0
    %18 = vsyncpa [#allocation6], 0
    %s19 = scalar_lea.sflag [#allocation6], 1
    %20 = vsyncpa %s19, 0
    loop: start=0, step=1, limit=10
    $region2: #{tpu_custom_call.1} parent=1 // loop_pre_header
      _
    $region3: #{tpu_custom_call.1} parent=1 // loop_header
      %s22 = sphi 0, %s26
      %p23 = scmp.ge.s32.totalorder %s22, 10
      %s29 = sphi 0, %s41
      %s30 = sphi 0, %s37
      %s31 = sphi 0, %s29
      %s32 = sphi 0, %s30
      %s33 = sphi 0, %s31
      %s34 = sphi 0, %s32
      %s42 = sphi 0, %s42
      %s44 = sphi 0, %s42
      %s45 = sphi 0, %s44
      %s59 = sphi 0, %s45
      %s67 = sphi 0, %s69
      %s70 = sphi 0, %s67
      %s71 = sphi 0, %s70
      %s87 = sphi 0, %s71
      %s93 = sphi 0, %s95
      %s96 = sphi 0, %s93
      %s97 = sphi 0, %s96
      %s113 = sphi 0, %s97
      %s117 = sphi 0, %s117
      %s119 = sphi 0, %s117
      %s120 = sphi 0, %s119
      %s134 = sphi 0, %s120
      %s140 = sphi 0, %s142
      %s143 = sphi 0, %s140
      %s144 = sphi 0, %s143
      %s160 = sphi 0, %s144
      %s166 = sphi 0, %s168
      %s169 = sphi 0, %s166
      %s170 = sphi 0, %s169
      %s186 = sphi 0, %s170
    $region4: #{tpu_custom_call.1} parent=1 // loop_header_branch
      %25 = sbr.rel (%p23) target = $region8
    $region5: #{tpu_custom_call.1} parent=1 // loop_body
      %s27 = ssub.s32 %s22, 1
      %s28 = ssub.s32 %s22, 2
      %s35 = sadd.s32 1, %s30
      %p36 = scmp.ge.s32.totalorder %s35, 4
      %s37 = scalar_select %p36, 0, %s35
      %s38 = sadd.s32 1, %s29
      %s39 = scalar_select %p36, %s38, %s29
      %p40 = scmp.ge.s32.totalorder %s39, 2
      %s41 = scalar_select %p40, 0, %s39
      %s43 = sadd.s32 %s42, 1
      %p46 = scmp.eq.s32.totalorder %s22, 7
      %p47 = scmp.ne.s32.totalorder %s42, %s44
      %p48 = scmp.eq.s32.totalorder %s22, 0
      %p49 = por %p47, %p48
      %p50 = scmp.ne.s32.totalorder %s42, %s44
      %p51 = scmp.eq.s32.totalorder %s27, 7
      %p52 = por %p50, %p51
      %p53 = scmp.ne.s32.totalorder %s44, %s45
      %p54 = scmp.eq.s32.totalorder %s27, 0
      %p55 = por %p53, %p54
      %p56 = scmp.ne.s32.totalorder %s44, %s45
      %p57 = scmp.eq.s32.totalorder %s28, 7
      %p58 = por %p56, %p57
      %p60 = scmp.ne.s32.totalorder %s45, %s59
      %p61 = scmp.eq.s32.totalorder %s28, 0
      %p62 = por %p60, %p61
      %s63 = ssub.s32 %s30, %s37
      %s64 = ssub.s32 %s29, %s41
      %s65 = sor.u32 %s63, %s64
      %p66 = scmp.eq.s32.totalorder %s65, 0
      %s68 = sadd.s32 %s67, 1
      %s69 = scalar_select %p66, %s67, %s68
      %p72 = pneg %p66
      %p73 = scmp.eq.s32.totalorder %s22, 7
      %p74 = por %p72, %p73
      %p75 = scmp.ne.s32.totalorder %s67, %s70
      %p76 = scmp.eq.s32.totalorder %s22, 0
      %p77 = por %p75, %p76
      %p78 = scmp.ne.s32.totalorder %s67, %s70
      %p79 = scmp.eq.s32.totalorder %s27, 7
      %p80 = por %p78, %p79
      %p81 = scmp.ne.s32.totalorder %s70, %s71
      %p82 = scmp.eq.s32.totalorder %s27, 0
      %p83 = por %p81, %p82
      %p84 = scmp.ne.s32.totalorder %s70, %s71
      %p85 = scmp.eq.s32.totalorder %s28, 7
      %p86 = por %p84, %p85
      %p88 = scmp.ne.s32.totalorder %s71, %s87
      %p89 = scmp.eq.s32.totalorder %s28, 0
      %p90 = por %p88, %p89
      %s91 = ssub.s32 %s29, %s41
      %p92 = scmp.eq.s32.totalorder %s91, 0
      %s94 = sadd.s32 %s93, 1
      %s95 = scalar_select %p92, %s93, %s94
      %p98 = pneg %p92
      %p99 = scmp.eq.s32.totalorder %s22, 7
      %p100 = por %p98, %p99
      %p101 = scmp.ne.s32.totalorder %s93, %s96
      %p102 = scmp.eq.s32.totalorder %s22, 0
      %p103 = por %p101, %p102
      %p104 = scmp.ne.s32.totalorder %s93, %s96
      %p105 = scmp.eq.s32.totalorder %s27, 7
      %p106 = por %p104, %p105
      %p107 = scmp.ne.s32.totalorder %s96, %s97
      %p108 = scmp.eq.s32.totalorder %s27, 0
      %p109 = por %p107, %p108
      %p110 = scmp.ne.s32.totalorder %s96, %s97
      %p111 = scmp.eq.s32.totalorder %s28, 7
      %p112 = por %p110, %p111
      %p114 = scmp.ne.s32.totalorder %s97, %s113
      %p115 = scmp.eq.s32.totalorder %s28, 0
      %p116 = por %p114, %p115
      %s118 = sadd.s32 %s117, 1
      %p121 = scmp.eq.s32.totalorder %s22, 7
      %p122 = scmp.ne.s32.totalorder %s117, %s119
      %p123 = scmp.eq.s32.totalorder %s22, 0
      %p124 = por %p122, %p123
      %p125 = scmp.ne.s32.totalorder %s117, %s119
      %p126 = scmp.eq.s32.totalorder %s27, 7
      %p127 = por %p125, %p126
      %p128 = scmp.ne.s32.totalorder %s119, %s120
      %p129 = scmp.eq.s32.totalorder %s27, 0
      %p130 = por %p128, %p129
      %p131 = scmp.ne.s32.totalorder %s119, %s120
      %p132 = scmp.eq.s32.totalorder %s28, 7
      %p133 = por %p131, %p132
      %p135 = scmp.ne.s32.totalorder %s120, %s134
      %p136 = scmp.eq.s32.totalorder %s28, 0
      %p137 = por %p135, %p136
      %s138 = ssub.s32 %s29, %s41
      %p139 = scmp.eq.s32.totalorder %s138, 0
      %s141 = sadd.s32 %s140, 1
      %s142 = scalar_select %p139, %s140, %s141
      %p145 = pneg %p139
      %p146 = scmp.eq.s32.totalorder %s22, 7
      %p147 = por %p145, %p146
      %p148 = scmp.ne.s32.totalorder %s140, %s143
      %p149 = scmp.eq.s32.totalorder %s22, 0
      %p150 = por %p148, %p149
      %p151 = scmp.ne.s32.totalorder %s140, %s143
      %p152 = scmp.eq.s32.totalorder %s27, 7
      %p153 = por %p151, %p152
      %p154 = scmp.ne.s32.totalorder %s143, %s144
      %p155 = scmp.eq.s32.totalorder %s27, 0
      %p156 = por %p154, %p155
      %p157 = scmp.ne.s32.totalorder %s143, %s144
      %p158 = scmp.eq.s32.totalorder %s28, 7
      %p159 = por %p157, %p158
      %p161 = scmp.ne.s32.totalorder %s144, %s160
      %p162 = scmp.eq.s32.totalorder %s28, 0
      %p163 = por %p161, %p162
      %s164 = ssub.s32 %s29, %s41
      %p165 = scmp.eq.s32.totalorder %s164, 0
      %s167 = sadd.s32 %s166, 1
      %s168 = scalar_select %p165, %s166, %s167
      %p171 = pneg %p165
      %p172 = scmp.eq.s32.totalorder %s22, 7
      %p173 = por %p171, %p172
      %p174 = scmp.ne.s32.totalorder %s166, %s169
      %p175 = scmp.eq.s32.totalorder %s22, 0
      %p176 = por %p174, %p175
      %p177 = scmp.ne.s32.totalorder %s166, %s169
      %p178 = scmp.eq.s32.totalorder %s27, 7
      %p179 = por %p177, %p178
      %p180 = scmp.ne.s32.totalorder %s169, %s170
      %p181 = scmp.eq.s32.totalorder %s27, 0
      %p182 = por %p180, %p181
      %p183 = scmp.ne.s32.totalorder %s169, %s170
      %p184 = scmp.eq.s32.totalorder %s28, 7
      %p185 = por %p183, %p184
      %p187 = scmp.ne.s32.totalorder %s170, %s186
      %p188 = scmp.eq.s32.totalorder %s28, 0
      %p189 = por %p187, %p188
      %p190 = scmp.le.s32.totalorder 1, %s22
      %p191 = scmp.lt.s32.totalorder %s22, 9
      %p192 = pnand %p190, %p191
      %p193 = pneg %p192
      // Predicated region
      $region9: #{tpu_custom_call.1} parent=5 // pred_check
        _
      $region10: #{tpu_custom_call.1} parent=5 // pred_check_branch
        %195 = sbr.rel (%p192) target = $region12
      $region11: #{tpu_custom_call.1} parent=5 // pred_region
        %s196 = ssub.s32 %s22, 1
        // Predicated region
        $region13: #{tpu_custom_call.1} parent=11 // pred_check
          %p197 = pneg %p55
        $region14: #{tpu_custom_call.1} parent=11 // pred_check_branch
          %199 = sbr.rel (%p197) target = $region16
        $region15: #{tpu_custom_call.1} parent=11 // pred_region
          _
        $region16: #{tpu_custom_call.1} parent=11 // pred_fallthru
          _
        // Predicated region
        $region17: #{tpu_custom_call.1} parent=11 // pred_check
          %p200 = pneg %p130
        $region18: #{tpu_custom_call.1} parent=11 // pred_check_branch
          %202 = sbr.rel (%p200) target = $region20
        $region19: #{tpu_custom_call.1} parent=11 // pred_region
          _
        $region20: #{tpu_custom_call.1} parent=11 // pred_fallthru
          _
      $region12: #{tpu_custom_call.1} parent=5 // pred_fallthru
        _
      %p203 = scmp.lt.s32.totalorder %s22, 8
      // Predicated region
      $region21: #{tpu_custom_call.1} parent=5 // pred_check
        %p204 = pneg %p203
      $region22: #{tpu_custom_call.1} parent=5 // pred_check_branch
        %206 = sbr.rel (%p204) target = $region24
      $region23: #{tpu_custom_call.1} parent=5 // pred_region
        // Predicated region
        $region25: #{tpu_custom_call.1} parent=23 // pred_check
          %p207 = pneg %p77
        $region26: #{tpu_custom_call.1} parent=23 // pred_check_branch
          %209 = sbr.rel (%p207) target = $region28
        $region27: #{tpu_custom_call.1} parent=23 // pred_region
          %s210 = sand.u32 %s67, 1
          %s211 = scalar_lea.sflag [#allocation5], %s210
          %s212 = sand.u32 %s67, 1
          %s213 = smul.addr %s212, 8
          %s214 = scalar_lea.vmem [#allocation4], %s213
          %s216 = ssub.s32 128, 128
          %217 = vsyncadd %s211, %s216
          %s218 = smul.addr %s30, 2
          %s219 = sadd.s32 %s29, %s218
          %s220 = smul.addr %s219, 128
          %s221 = scalar_lea.hbm %s1, %s220
          %s223 = sshll.u32 %s214, 4
          %s224 = int_to_ptr.vmem [resolvable:$true] %s223
          %226 = dma.hbm_to_vmem [thread:$0]  %s221, 128, %s224, %s211
        $region28: #{tpu_custom_call.1} parent=23 // pred_fallthru
          _
        // Predicated region
        $region29: #{tpu_custom_call.1} parent=23 // pred_check
          %p227 = pneg %p103
        $region30: #{tpu_custom_call.1} parent=23 // pred_check_branch
          %229 = sbr.rel (%p227) target = $region32
        $region31: #{tpu_custom_call.1} parent=23 // pred_region
          %s230 = sand.u32 %s93, 1
          %s231 = scalar_lea.sflag [#allocation8], %s230
          %s232 = sand.u32 %s93, 1
          %s233 = smul.addr %s232, 16
          %s234 = scalar_lea.vmem [#allocation7], %s233
          %s236 = ssub.s32 256, 256
          %237 = vsyncadd %s231, %s236
          %s238 = smul.addr %s29, 128
          %s239 = scalar_lea.hbm %s2, %s238
          %s240 = sshll.u32 %s234, 4
          %s241 = int_to_ptr.vmem [resolvable:$true] %s240
          %246 = dma.hbm_to_vmem [thread:$0]  %s239, 256, %s241, %s231, 256, 128, 8
        $region32: #{tpu_custom_call.1} parent=23 // pred_fallthru
          _
      $region24: #{tpu_custom_call.1} parent=5 // pred_fallthru
        _
      %p247 = scmp.le.s32.totalorder 1, %s22
      %p248 = scmp.lt.s32.totalorder %s22, 9
      %p249 = pnand %p247, %p248
      %p250 = pneg %p249
      // Predicated region
      $region33: #{tpu_custom_call.1} parent=5 // pred_check
        _
      $region34: #{tpu_custom_call.1} parent=5 // pred_check_branch
        %252 = sbr.rel (%p249) target = $region36
      $region35: #{tpu_custom_call.1} parent=5 // pred_region
        %s253 = ssub.s32 %s22, 1
        %s254 = sand.u32 %s70, 1
        %s255 = scalar_lea.sflag [#allocation5], %s254
        %s256 = sand.u32 %s70, 1
        %s257 = smul.addr %s256, 8
        %s258 = scalar_lea.vmem [#allocation4], %s257
        // Predicated region
        $region37: #{tpu_custom_call.1} parent=35 // pred_check
          %p259 = pneg %p83
        $region38: #{tpu_custom_call.1} parent=35 // pred_check_branch
          %261 = sbr.rel (%p259) target = $region40
        $region39: #{tpu_custom_call.1} parent=35 // pred_region
          %262 = dma.done %s255, 128
        $region40: #{tpu_custom_call.1} parent=35 // pred_fallthru
          _
        %s263 = sand.u32 %s96, 1
        %s264 = scalar_lea.sflag [#allocation8], %s263
        %s265 = sand.u32 %s96, 1
        %s266 = smul.addr %s265, 16
        %s267 = scalar_lea.vmem [#allocation7], %s266
        // Predicated region
        $region41: #{tpu_custom_call.1} parent=35 // pred_check
          %p268 = pneg %p109
        $region42: #{tpu_custom_call.1} parent=35 // pred_check_branch
          %270 = sbr.rel (%p268) target = $region44
        $region43: #{tpu_custom_call.1} parent=35 // pred_region
          %271 = dma.done %s264, 256
        $region44: #{tpu_custom_call.1} parent=35 // pred_fallthru
          _
        %p272 = pneg %p55
        %p273 = pneg %p52
        %s274 = sand.u32 %s70, 1
        %s275 = scalar_lea.sflag [#allocation5], %s274
        %s276 = sand.u32 %s70, 1
        %s277 = smul.addr %s276, 8
        %s278 = scalar_lea.vmem [#allocation4], %s277
        %p279 = pneg %p83
        %p280 = pneg %p80
        %s281 = sand.u32 %s96, 1
        %s282 = scalar_lea.sflag [#allocation8], %s281
        %s283 = sand.u32 %s96, 1
        %s284 = smul.addr %s283, 16
        %s285 = scalar_lea.vmem [#allocation7], %s284
        %p286 = pneg %p109
        %p287 = pneg %p106
        %p288 = pneg %p130
        %p289 = pneg %p127
        %p290 = pneg %p156
        %p291 = pneg %p153
        %p292 = scmp.lt.s32.totalorder %s31, 1
        %s293 = scalar_select %p292, %s31, 1
        %s294 = scalar_lea.vmem %s4, %s293
        %p295 = pneg %p182
        %p296 = pneg %p179
        %s297 = sand.u32 %s169, 1
        %s298 = scalar_lea.sflag [#allocation6], %s297
        %s299 = sand.u32 %s169, 1
        %s300 = scalar_lea.vmem [#allocation9], %s299
        %p301 = scmp.lt.s32.totalorder %s31, 1
        %s302 = scalar_select %p301, %s31, 1
        %s303 = scalar_lea.vmem %s4, %s302
        %p304 = scmp.eq.s32.totalorder %s32, 0
        // Predicated region
        $region45: #{tpu_custom_call.1} parent=35 // pred_check
          %p305 = pneg %p304
        $region46: #{tpu_custom_call.1} parent=35 // pred_check_branch
          %307 = sbr.rel (%p305) target = $region48
        $region47: #{tpu_custom_call.1} parent=35 // pred_region
          %s308 = sld [smem:[#allocation3]]
          %v309 = vld [vmem:[%s267] sm:$0xff]
          %v310 = vld [vmem:[%s267 + $0x8] sm:$0xff]
          %v311 = vld [vmem:[%s3] sm:$0x1]
          %v313 = vlaneseq
          %v314 = vshrl.u32 %v313, 7
          %v315 = vsub.s32 0, %v314
          %v316 = vrot.slane %v311, %v315
          %v318 = vsub.f32 %v309, %v316
          %v319 = vsub.f32 %v310, %v316
          %v320 = vstv %s308
          %v321 = vmul.f32 %v318, %v320
          %v322 = vmul.f32 %v319, %v320
          %323 = vmax.xlane.f32.xlu0 %v321
          %v324 = vpop.xlane.xlu0 %323
          %325 = vmax.xlane.f32.xlu0 %v322
          %v326 = vpop.xlane.xlu0 %325
          %v327 = vsub.f32 %v321, %v324
          %v328 = vsub.f32 %v322, %v326
          %v329 = vmul.f32 %v327, 1.442695
          %v330 = vpow.pop %v329
          %v331 = vmul.f32 %v328, 1.442695
          %v332 = vpow.pop %v331
          %333 = vadd.xlane.f32.xlu0 %v330
          %v334 = vpop.xlane.xlu0 %333
          %335 = vadd.xlane.f32.xlu0 %v332
          %v336 = vpop.xlane.xlu0 %335
          %v337 = vrcp.pop %v334
          %v338 = vrcp.pop %v336
          %v339 = vmul.f32 %v330, %v337
          %v340 = vmul.f32 %v332, %v338
          %341 = vst [vmem:[#allocation2] sm:$0xff] %v339
          %s342 = scalar_lea.vmem [#allocation2], 8
          %343 = vst [vmem:[%s342] sm:$0xff] %v340
          %v344 = vadd.f32 %v339, %v340
          %s345 = scalar_lea.vmem [#allocation2], 16
          %346 = vst [vmem:[%s345] sm:$0xff] %v344
          %v347 = vadd.f32 %v309, %v310
          %v348 = vrot.slane %v347, 4
          %v349 = vadd.f32 %v347, %v348
          %v350 = vrot.slane %v349, 2
          %v351 = vadd.f32 %v349, %v350
          %v352 = vrot.slane %v351, 1
          %v353 = vadd.f32 %v351, %v352
          %354 = vst [vmem:[%s300] sm:$0x1] %v353
          %vm355 = vcmask 0
          %356 = vst.msk [vmem:[%s303] sm:$0x1] %vm355, 0.0
        $region48: #{tpu_custom_call.1} parent=35 // pred_fallthru
          _
        %v357 = vld [vmem:[%s258] sm:$0xff]
        %v358 = vmul.f32 %v357, 10.0
        %359 = vmax.xlane.f32.xlu0 %v358
        %v360 = vpop.xlane.xlu0 %359
        %v361 = vsub.f32 %v358, %v360
        %v362 = vmul.f32 %v361, 1.442695
        %v363 = vpow.pop %v362
        %364 = vadd.xlane.f32.xlu0 %v363
        %v365 = vpop.xlane.xlu0 %364
        %v366 = vlog2.pop %v365
        %v367 = vmul.f32 %v366, 0.6931472
        %p368 = scmp.eq.s32.totalorder %s32, 1
        %s369 = scalar_select %p368, 0, 2
        %s370 = scalar_select %p304, 1, %s369
        %s371 = smul.u32 %s370, 8
        %s372 = scalar_lea.vmem [#allocation2], %s371
        %v373 = vld [vmem:[%s372] sm:$0xff]
        %p374 = scmp.lt.s32.totalorder %s32, 2
        %s375 = scalar_select %p374, 1.0, 2.0
        %v376 = vmul.f32 %v373, %v361
        %377 = vadd.xlane.f32.xlu0 %v376
        %v378 = vpop.xlane.xlu0 %377
        %v379 = vstv %s375
        %v380 = vmul.f32 %v379, %v367
        %v381 = vsub.f32 %v380, %v378
        %v382 = vlaneseq
        %v383 = vshrl.u32 %v382, 7
        %s384 = smul.u32 %s31, 8
        %v385 = vstv %s384
        %v386 = vadd.s32 %v383, %v385
        %vm387 = vcmp.lt.s32.totalorder %v386, 12
        %v388 = vsel %vm387, %v381, 0.0
        %v389 = vld [vmem:[%s303] sm:$0x1]
        %vm390 = vcmask 7168
        %v391 = vsel %vm390, %v388, 0.0
        %392 = vadd.xlane.f32.xlu0 %v391
        %v393 = vpop.xlane.xlu0 %392
        %v394 = vrot.slane %v393, 4
        %v395 = vadd.f32 %v393, %v394
        %v396 = vrot.slane %v395, 2
        %v397 = vadd.f32 %v395, %v396
        %v398 = vrot.slane %v397, 1
        %v399 = vadd.f32 %v397, %v398
        %s400 = vtos %v399
        %v401 = vstv %s400
        %v402 = vadd.f32 %v389, %v401
        %vm403 = vcmask 0
        %404 = vst.msk [vmem:[%s303] sm:$0x1] %vm403, %v402
        %p405 = scmp.lt.s32.totalorder %s31, 1
        %s406 = scalar_select %p405, %s31, 1
        %s407 = scalar_lea.vmem %s4, %s406
        %s408 = sand.u32 %s169, 1
        %s409 = scalar_lea.sflag [#allocation6], %s408
        %s410 = sand.u32 %s169, 1
        %s411 = scalar_lea.vmem [#allocation9], %s410
        // Predicated region
        $region49: #{tpu_custom_call.1} parent=35 // pred_check
          %p412 = pneg %p153
        $region50: #{tpu_custom_call.1} parent=35 // pred_check_branch
          %414 = sbr.rel (%p412) target = $region52
        $region51: #{tpu_custom_call.1} parent=35 // pred_region
          _
        $region52: #{tpu_custom_call.1} parent=35 // pred_fallthru
          _
        // Predicated region
        $region53: #{tpu_custom_call.1} parent=35 // pred_check
          %p415 = pneg %p179
        $region54: #{tpu_custom_call.1} parent=35 // pred_check_branch
          %417 = sbr.rel (%p415) target = $region56
        $region55: #{tpu_custom_call.1} parent=35 // pred_region
          %s419 = ssub.s32 16, 16
          %420 = vsyncadd %s409, %s419
          %s421 = smul.addr %s31, 16
          %s422 = scalar_lea.hbm %s5, %s421
          %s424 = sshll.u32 %s411, 4
          %s425 = int_to_ptr.vmem [resolvable:$true] %s424
          %427 = dma.vmem_to_hbm [thread:$0]  %s425, 16, %s422, %s409
        $region56: #{tpu_custom_call.1} parent=35 // pred_fallthru
          _
      $region36: #{tpu_custom_call.1} parent=5 // pred_fallthru
        _
      %p428 = scmp.le.s32.totalorder 2, %s22
      // Predicated region
      $region57: #{tpu_custom_call.1} parent=5 // pred_check
        %p429 = pneg %p428
      $region58: #{tpu_custom_call.1} parent=5 // pred_check_branch
        %431 = sbr.rel (%p429) target = $region60
      $region59: #{tpu_custom_call.1} parent=5 // pred_region
        %s432 = ssub.s32 %s22, 2
        // Predicated region
        $region61: #{tpu_custom_call.1} parent=59 // pred_check
          %p433 = pneg %p159
        $region62: #{tpu_custom_call.1} parent=59 // pred_check_branch
          %435 = sbr.rel (%p433) target = $region64
        $region63: #{tpu_custom_call.1} parent=59 // pred_region
          %p436 = scmp.lt.s32.totalorder %s33, 1
          %s437 = scalar_select %p436, %s33, 1
          %s438 = scalar_lea.vmem %s4, %s437
        $region64: #{tpu_custom_call.1} parent=59 // pred_fallthru
          _
        // Predicated region
        $region65: #{tpu_custom_call.1} parent=59 // pred_check
          %p439 = pneg %p185
        $region66: #{tpu_custom_call.1} parent=59 // pred_check_branch
          %441 = sbr.rel (%p439) target = $region68
        $region67: #{tpu_custom_call.1} parent=59 // pred_region
          %s442 = sand.u32 %s170, 1
          %s443 = scalar_lea.sflag [#allocation6], %s442
          %s444 = sand.u32 %s170, 1
          %s445 = scalar_lea.vmem [#allocation9], %s444
          %446 = dma.done %s443, 16
        $region68: #{tpu_custom_call.1} parent=59 // pred_fallthru
          _
      $region60: #{tpu_custom_call.1} parent=5 // pred_fallthru
        _
    $region6: #{tpu_custom_call.1} parent=1 // loop_footer
      %s26 = sadd.s32 1, %s22
    $region7: #{tpu_custom_call.1} parent=1 // loop_footer_branch
      %21 = sbr.rel target = $region3
    $region8: #{tpu_custom_call.1} parent=1 // loop_exit
      _
    %447 = vsyncpa [#allocation5], 1
    %s448 = scalar_lea.sflag [#allocation5], 1
    %449 = vsyncpa %s448, 1
    %450 = vsyncpa [#allocation8], 1
    %s451 = scalar_lea.sflag [#allocation8], 1
    %452 = vsyncpa %s451, 1
    %453 = vsyncpa [#allocation6], 1
    %s454 = scalar_lea.sflag [#allocation6], 1
    %455 = vsyncpa %s454, 1

</llo_original>
